<compile_context>
chip_gen: v5e
topology: v5e:2x2
jax: 0.10.0
libtpu: 0.0.40
codegen_flags: <defaults>
</compile_context>

<pallas_src>
import jax
import jax.numpy as jnp
from jax.experimental import pallas as pl
from jax.experimental.pallas import tpu as pltpu


def _round_up(x, m):
    return ((x + m - 1) // m) * m


def _cond_mlp_kernel(idx_ref,                 # (block_b, pos_count) int32, VMEM
                     coef_ref,                # (1,) f32, SMEM
                     w0_ref, b0_ref,          # (W0R_pad, Hp) bf16, (1, Hp) f32
                     w1_ref, b1_ref,          # (Hp, Hp) bf16,     (1, Hp) f32
                     wo_ref, bo_ref,          # (Hp, Op) bf16,     (1, Op) f32
                     o_ref):                  # (block_b, Op) f32
    block_b, pos_count = idx_ref.shape
    w0r_pad = w0_ref.shape[0]

    # --- Layer 0: build the multi-hot selection matrix and hit the MXU. ---
    # Each position p owns rows [p*num_classes, (p+1)*num_classes) of the
    # expanded W0 (last row of each block is the all-zero pad row), so the
    # one-hot encoding of the whole concatenated input is a multi-hot row
    # selector.  Ranges are disjoint -> summing per-position one-hots is exact.
    idx = idx_ref[...]                                              # (block_b, pos_count)
    col = jax.lax.broadcasted_iota(jnp.int32, (block_b, w0r_pad), 1)
    onehot = jnp.zeros((block_b, w0r_pad), jnp.float32)
    for p in range(pos_count):                                      # static, small (2*max_len)
        onehot = onehot + jnp.where(col == idx[:, p:p + 1], 1.0, 0.0)

    h = jnp.dot(onehot.astype(jnp.bfloat16), w0_ref[...],
                preferred_element_type=jnp.float32) + b0_ref[...]
    h = jnp.maximum(h, 0.0)

    # --- Layer 1: Linear(Hp -> Hp) + ReLU (lane-dense, MXU, f32 accum). ---
    h = jnp.dot(h.astype(jnp.bfloat16), w1_ref[...],
                preferred_element_type=jnp.float32) + b1_ref[...]
    h = jnp.maximum(h, 0.0)

    # --- Output head: Linear(Hp -> Op), scaled by coef (SMEM scalar). ---
    out = jnp.dot(h.astype(jnp.bfloat16), wo_ref[...],
                  preferred_element_type=jnp.float32) + bo_ref[...]
    o_ref[...] = out * coef_ref[0]


def prepare_params(params, *, num_tokens, max_len, lane=128):
    """Pad/expand the MLP parameters once for the lane-dense fused kernel."""
    w0, b0, w1, b1, wo, bo = params
    F2, H = w0.shape
    O = wo.shape[1]
    assert F2 == 2 * max_len * num_tokens
    num_classes = num_tokens + 1
    pos_count = 2 * max_len
    Hp = _round_up(H, lane)
    Op = _round_up(O, lane)
    W0R = pos_count * num_classes
    W0R_pad = _round_up(W0R, lane)          # lane-dense one-hot / MXU contraction dim

    # Expand W0: one extra all-zero row per position for the pad/eos id, then
    # pad rows/cols to (W0R_pad, Hp).
    w0e = w0.reshape(pos_count, num_tokens, H)
    w0e = jnp.pad(w0e, ((0, 0), (0, 1), (0, Hp - H)))
    w0e = w0e.reshape(W0R, Hp)
    w0e = jnp.pad(w0e, ((0, W0R_pad - W0R), (0, 0)))

    b0p = jnp.pad(b0.reshape(1, H), ((0, 0), (0, Hp - H)))
    w1p = jnp.pad(w1, ((0, Hp - H), (0, Hp - H)))
    b1p = jnp.pad(b1.reshape(1, H), ((0, 0), (0, Hp - H)))
    wop = jnp.pad(wo, ((0, Hp - H), (0, Op - O)))
    bop = jnp.pad(bo.reshape(1, O), ((0, 0), (0, Op - O)))

    # bf16 weights (MXU-native everywhere); biases stay f32 for f32 VPU adds.
    return dict(w0e=w0e.astype(jnp.bfloat16), b0=b0p,
                w1=w1p.astype(jnp.bfloat16), b1=b1p,
                wo=wop.astype(jnp.bfloat16), bo=bop,
                num_tokens=num_tokens, max_len=max_len,
                H=H, O=O, Hp=Hp, Op=Op, W0R_pad=W0R_pad)


def conditional_dbg_flownet_forward(x_tokens, outcome_tokens, prepared, *, coef=1.0):
    """Fused forward: token ids in -> (B, num_tokens+1) logits/log-flow out."""
    num_tokens = prepared["num_tokens"]
    max_len = prepared["max_len"]
    num_classes = num_tokens + 1
    pos_count = 2 * max_len
    pad_id = num_tokens
    B = x_tokens.shape[0]
    assert outcome_tokens.shape[0] == B

    # Tiny int-only glue: pad each id sequence to max_len with the pad id
    # (== all-zero one-hot row) and concatenate state + outcome positions.
    def pad_seq(t):
        return jnp.pad(t.astype(jnp.int32), ((0, 0), (0, max_len - t.shape[1])),
                       constant_values=pad_id)

    tok = jnp.concatenate([pad_seq(x_tokens), pad_seq(outcome_tokens)], axis=1)  # (B, pos_count)

    # Fixed MXU-friendly batch tile: single grid step for small B, 256-row
    # 'parallel' tiles for large B (bounds VMEM, fills the MXU on all gens).
    block_b = min(256, _round_up(B, 8))
    B_pad = _round_up(B, block_b)
    tok = jnp.pad(tok, ((0, B_pad - B), (0, 0)), constant_values=pad_id)

    # Flat row index into the expanded W0: position offset + token id.
    flat_idx = tok + (jnp.arange(pos_count, dtype=jnp.int32) * num_classes)[None, :]

    coef_arr = jnp.asarray(coef, jnp.float32).reshape(1)

    Hp, Op, W0R_pad = prepared["Hp"], prepared["Op"], prepared["W0R_pad"]

    out = pl.pallas_call(
        _cond_mlp_kernel,
        out_shape=jax.ShapeDtypeStruct((B_pad, Op), jnp.float32),
        grid=(B_pad // block_b,),
        in_specs=[
            pl.BlockSpec((block_b, pos_count), lambda i: (i, 0)),        # flat token indices
            pl.BlockSpec(memory_space=pltpu.MemorySpace.SMEM),           # coef scalar
            pl.BlockSpec((W0R_pad, Hp), lambda i: (0, 0)),               # w0 (expanded, bf16)
            pl.BlockSpec((1, Hp), lambda i: (0, 0)),                     # b0
            pl.BlockSpec((Hp, Hp), lambda i: (0, 0)),                    # w1 (bf16)
            pl.BlockSpec((1, Hp), lambda i: (0, 0)),                     # b1
            pl.BlockSpec((Hp, Op), lambda i: (0, 0)),                    # wo (bf16)
            pl.BlockSpec((1, Op), lambda i: (0, 0)),                     # bo
        ],
        out_specs=pl.BlockSpec((block_b, Op), lambda i: (i, 0)),
        compiler_params=pltpu.CompilerParams(dimension_semantics=("parallel",)),
    )(flat_idx, coef_arr, prepared["w0e"], prepared["b0"],
      prepared["w1"], prepared["b1"], prepared["wo"], prepared["bo"])

    return out[:B, :prepared["O"]]


if __name__ == "__main__":
    # Small config consistent with the module's __init__.
    num_bits = 2
    seq_max_len = 8
    num_tokens = 2 ** num_bits * 2            # 8 tokens
    max_len = seq_max_len // num_bits         # 4 positions
    num_hid = 32                              # args.cond_num_hidden
    num_outputs = num_tokens + 1              # policy logits + log-flow
    B, L = 16, 3                              # batch, (partial) state length <= max_len
    coef = 2.0                                # non-unit coef exercised & checked

    key = jax.random.PRNGKey(0)
    kx, ko, kp = jax.random.split(key, 3)
    # token ids in [0, num_tokens]; id == num_tokens one-hots to an all-zero row
    x = jax.random.randint(kx, (B, L), 0, num_tokens + 1, dtype=jnp.int32)
    outcome = jax.random.randint(ko, (B, max_len), 0, num_tokens + 1, dtype=jnp.int32)

    def linear_init(k, fan_in, fan_out):
        # deterministic, PyTorch-nn.Linear-style uniform init
        kw, kb = jax.random.split(k)
        bound = 1.0 / (fan_in ** 0.5)
        w = jax.random.uniform(kw, (fan_in, fan_out), jnp.float32, -bound, bound)
        b = jax.random.uniform(kb, (1, fan_out), jnp.float32, -bound, bound)
        return w, b

    F2 = 2 * max_len * num_tokens             # 64 concatenated features
    k0, k1, k2 = jax.random.split(kp, 3)
    w0, b0 = linear_init(k0, F2, num_hid)
    w1, b1 = linear_init(k1, num_hid, num_hid)
    wo, bo = linear_init(k2, num_hid, num_outputs)
    params = (w0, b0, w1, b1, wo, bo)

    prepared = prepare_params(params, num_tokens=num_tokens, max_len=max_len)
    out = conditional_dbg_flownet_forward(x, outcome, prepared, coef=coef)
    out = jax.block_until_ready(out)

    # Pure-JAX f32 reference mirroring the PyTorch forward exactly
    # (one-hot drop-last, zero-pad, flatten, concat, MLP, * coef).
    inp_x = jax.nn.one_hot(x, num_tokens + 1, dtype=jnp.float32)[:, :, :-1]
    out_x = jax.nn.one_hot(outcome, num_tokens + 1, dtype=jnp.float32)[:, :, :-1]
    inp = jnp.zeros((B, max_len, num_tokens), jnp.float32).at[:, :inp_x.shape[1], :].set(inp_x)
    oc = jnp.zeros((B, max_len, num_tokens), jnp.float32).at[:, :out_x.shape[1], :].set(out_x)
    feat = jnp.concatenate([inp.reshape(B, -1), oc.reshape(B, -1)], axis=-1)
    ref = jnp.maximum(feat @ w0 + b0, 0.0)
    ref = jnp.maximum(ref @ w1 + b1, 0.0)
    ref = (ref @ wo + bo) * coef

    assert out.shape == (B, num_outputs)
    # Kernel runs bf16-weight / f32-accumulate matmuls (MXU-native), so compare
    # against the f32 reference with a bf16-appropriate tolerance.
    assert jnp.allclose(out, ref, atol=2e-2, rtol=2e-2), float(jnp.max(jnp.abs(out - ref)))

    print("KERNEL_OK")
</pallas_src>

<mosaic_0001>
module attributes {stable_mosaic.version = 11 : i64} {
  func.func @_cond_mlp_kernel(%arg0: i32, %arg1: memref<16x8xi32, #tpu.memory_space<vmem>>, %arg2: memref<1xf32, #tpu.memory_space<smem>>, %arg3: memref<128x128xbf16, #tpu.memory_space<vmem>>, %arg4: memref<1x128xf32, #tpu.memory_space<vmem>>, %arg5: memref<128x128xbf16, #tpu.memory_space<vmem>>, %arg6: memref<1x128xf32, #tpu.memory_space<vmem>>, %arg7: memref<128x128xbf16, #tpu.memory_space<vmem>>, %arg8: memref<1x128xf32, #tpu.memory_space<vmem>>, %arg9: memref<16x128xf32, #tpu.memory_space<vmem>>) attributes {dimension_semantics = [#tpu.dimension_semantics<parallel>], iteration_bounds = array<i64: 1>, scalar_prefetch = 0 : i64, scratch_operands = 0 : i64, tpu.core_type = #tpu.core_type<tc>, window_params = [{transform_indices = @transform_0, window_bounds = array<i64: 16, 8>}, {transform_indices = @transform_1, window_bounds = array<i64: 1>}, {pipeline_mode = #tpu.pipeline_mode<synchronous>, transform_indices = @transform_2, window_bounds = array<i64: 128, 128>}, {pipeline_mode = #tpu.pipeline_mode<synchronous>, transform_indices = @transform_3, window_bounds = array<i64: 1, 128>}, {pipeline_mode = #tpu.pipeline_mode<synchronous>, transform_indices = @transform_4, window_bounds = array<i64: 128, 128>}, {pipeline_mode = #tpu.pipeline_mode<synchronous>, transform_indices = @transform_5, window_bounds = array<i64: 1, 128>}, {pipeline_mode = #tpu.pipeline_mode<synchronous>, transform_indices = @transform_6, window_bounds = array<i64: 128, 128>}, {pipeline_mode = #tpu.pipeline_mode<synchronous>, transform_indices = @transform_7, window_bounds = array<i64: 1, 128>}, {transform_indices = @transform_8, window_bounds = array<i64: 16, 128>}]} {
    %c0 = arith.constant 0 : index
    %c0_0 = arith.constant 0 : index
    %0 = vector.load %arg1[%c0, %c0_0] : memref<16x8xi32, #tpu.memory_space<vmem>>, vector<16x8xi32>
    %1 = tpu.iota {dimensions = array<i32: 1>} : vector<16x128xi32>
    %cst = arith.constant 0.000000e+00 : f32
    %2 = vector.broadcast %cst : f32 to vector<16x128xf32>
    %3 = vector.extract_strided_slice %0 {offsets = [0, 0], sizes = [16, 1], strides = [1, 1]} : vector<16x8xi32> to vector<16x1xi32>
    %4 = vector.broadcast %3 : vector<16x1xi32> to vector<16x128xi32>
    %5 = arith.cmpi eq, %1, %4 : vector<16x128xi32>
    %cst_1 = arith.constant 1.000000e+00 : f32
    %cst_2 = arith.constant 0.000000e+00 : f32
    %6 = vector.broadcast %cst_1 : f32 to vector<16x128xf32>
    %7 = vector.broadcast %cst_2 : f32 to vector<16x128xf32>
    %8 = arith.select %5, %6, %7 : vector<16x128xi1>, vector<16x128xf32>
    %9 = arith.addf %2, %8 : vector<16x128xf32>
    %10 = vector.extract_strided_slice %0 {offsets = [0, 1], sizes = [16, 1], strides = [1, 1]} : vector<16x8xi32> to vector<16x1xi32>
    %11 = vector.broadcast %10 : vector<16x1xi32> to vector<16x128xi32>
    %12 = arith.cmpi eq, %1, %11 : vector<16x128xi32>
    %cst_3 = arith.constant 1.000000e+00 : f32
    %cst_4 = arith.constant 0.000000e+00 : f32
    %13 = vector.broadcast %cst_3 : f32 to vector<16x128xf32>
    %14 = vector.broadcast %cst_4 : f32 to vector<16x128xf32>
    %15 = arith.select %12, %13, %14 : vector<16x128xi1>, vector<16x128xf32>
    %16 = arith.addf %9, %15 : vector<16x128xf32>
    %17 = vector.extract_strided_slice %0 {offsets = [0, 2], sizes = [16, 1], strides = [1, 1]} : vector<16x8xi32> to vector<16x1xi32>
    %18 = vector.broadcast %17 : vector<16x1xi32> to vector<16x128xi32>
    %19 = arith.cmpi eq, %1, %18 : vector<16x128xi32>
    %cst_5 = arith.constant 1.000000e+00 : f32
    %cst_6 = arith.constant 0.000000e+00 : f32
    %20 = vector.broadcast %cst_5 : f32 to vector<16x128xf32>
    %21 = vector.broadcast %cst_6 : f32 to vector<16x128xf32>
    %22 = arith.select %19, %20, %21 : vector<16x128xi1>, vector<16x128xf32>
    %23 = arith.addf %16, %22 : vector<16x128xf32>
    %24 = vector.extract_strided_slice %0 {offsets = [0, 3], sizes = [16, 1], strides = [1, 1]} : vector<16x8xi32> to vector<16x1xi32>
    %25 = vector.broadcast %24 : vector<16x1xi32> to vector<16x128xi32>
    %26 = arith.cmpi eq, %1, %25 : vector<16x128xi32>
    %cst_7 = arith.constant 1.000000e+00 : f32
    %cst_8 = arith.constant 0.000000e+00 : f32
    %27 = vector.broadcast %cst_7 : f32 to vector<16x128xf32>
    %28 = vector.broadcast %cst_8 : f32 to vector<16x128xf32>
    %29 = arith.select %26, %27, %28 : vector<16x128xi1>, vector<16x128xf32>
    %30 = arith.addf %23, %29 : vector<16x128xf32>
    %31 = vector.extract_strided_slice %0 {offsets = [0, 4], sizes = [16, 1], strides = [1, 1]} : vector<16x8xi32> to vector<16x1xi32>
    %32 = vector.broadcast %31 : vector<16x1xi32> to vector<16x128xi32>
    %33 = arith.cmpi eq, %1, %32 : vector<16x128xi32>
    %cst_9 = arith.constant 1.000000e+00 : f32
    %cst_10 = arith.constant 0.000000e+00 : f32
    %34 = vector.broadcast %cst_9 : f32 to vector<16x128xf32>
    %35 = vector.broadcast %cst_10 : f32 to vector<16x128xf32>
    %36 = arith.select %33, %34, %35 : vector<16x128xi1>, vector<16x128xf32>
    %37 = arith.addf %30, %36 : vector<16x128xf32>
    %38 = vector.extract_strided_slice %0 {offsets = [0, 5], sizes = [16, 1], strides = [1, 1]} : vector<16x8xi32> to vector<16x1xi32>
    %39 = vector.broadcast %38 : vector<16x1xi32> to vector<16x128xi32>
    %40 = arith.cmpi eq, %1, %39 : vector<16x128xi32>
    %cst_11 = arith.constant 1.000000e+00 : f32
    %cst_12 = arith.constant 0.000000e+00 : f32
    %41 = vector.broadcast %cst_11 : f32 to vector<16x128xf32>
    %42 = vector.broadcast %cst_12 : f32 to vector<16x128xf32>
    %43 = arith.select %40, %41, %42 : vector<16x128xi1>, vector<16x128xf32>
    %44 = arith.addf %37, %43 : vector<16x128xf32>
    %45 = vector.extract_strided_slice %0 {offsets = [0, 6], sizes = [16, 1], strides = [1, 1]} : vector<16x8xi32> to vector<16x1xi32>
    %46 = vector.broadcast %45 : vector<16x1xi32> to vector<16x128xi32>
    %47 = arith.cmpi eq, %1, %46 : vector<16x128xi32>
    %cst_13 = arith.constant 1.000000e+00 : f32
    %cst_14 = arith.constant 0.000000e+00 : f32
    %48 = vector.broadcast %cst_13 : f32 to vector<16x128xf32>
    %49 = vector.broadcast %cst_14 : f32 to vector<16x128xf32>
    %50 = arith.select %47, %48, %49 : vector<16x128xi1>, vector<16x128xf32>
    %51 = arith.addf %44, %50 : vector<16x128xf32>
    %52 = vector.extract_strided_slice %0 {offsets = [0, 7], sizes = [16, 1], strides = [1, 1]} : vector<16x8xi32> to vector<16x1xi32>
    %53 = vector.broadcast %52 : vector<16x1xi32> to vector<16x128xi32>
    %54 = arith.cmpi eq, %1, %53 : vector<16x128xi32>
    %cst_15 = arith.constant 1.000000e+00 : f32
    %cst_16 = arith.constant 0.000000e+00 : f32
    %55 = vector.broadcast %cst_15 : f32 to vector<16x128xf32>
    %56 = vector.broadcast %cst_16 : f32 to vector<16x128xf32>
    %57 = arith.select %54, %55, %56 : vector<16x128xi1>, vector<16x128xf32>
    %58 = arith.addf %51, %57 : vector<16x128xf32>
    %59 = arith.truncf %58 : vector<16x128xf32> to vector<16x128xbf16>
    %c0_17 = arith.constant 0 : index
    %c0_18 = arith.constant 0 : index
    %60 = vector.load %arg3[%c0_17, %c0_18] : memref<128x128xbf16, #tpu.memory_space<vmem>>, vector<128x128xbf16>
    %cst_19 = arith.constant dense<0.000000e+00> : vector<16x128xf32>
    %61 = tpu.matmul %59, %60, %cst_19 {dimension_numbers = #tpu.dot_dimension_numbers<[1], [0], [0], [1], [0, 0, 1, 1], [], []>} : vector<16x128xbf16>, vector<128x128xbf16>, vector<16x128xf32> -> vector<16x128xf32>
    %c0_20 = arith.constant 0 : index
    %c0_21 = arith.constant 0 : index
    %62 = vector.load %arg4[%c0_20, %c0_21] : memref<1x128xf32, #tpu.memory_space<vmem>>, vector<1x128xf32>
    %63 = vector.broadcast %62 : vector<1x128xf32> to vector<16x128xf32>
    %64 = arith.addf %61, %63 : vector<16x128xf32>
    %cst_22 = arith.constant 0.000000e+00 : f32
    %65 = vector.broadcast %cst_22 : f32 to vector<16x128xf32>
    %66 = arith.maximumf %64, %65 : vector<16x128xf32>
    %67 = arith.truncf %66 : vector<16x128xf32> to vector<16x128xbf16>
    %c0_23 = arith.constant 0 : index
    %c0_24 = arith.constant 0 : index
    %68 = vector.load %arg5[%c0_23, %c0_24] : memref<128x128xbf16, #tpu.memory_space<vmem>>, vector<128x128xbf16>
    %cst_25 = arith.constant dense<0.000000e+00> : vector<16x128xf32>
    %69 = tpu.matmul %67, %68, %cst_25 {dimension_numbers = #tpu.dot_dimension_numbers<[1], [0], [0], [1], [0, 0, 1, 1], [], []>} : vector<16x128xbf16>, vector<128x128xbf16>, vector<16x128xf32> -> vector<16x128xf32>
    %c0_26 = arith.constant 0 : index
    %c0_27 = arith.constant 0 : index
    %70 = vector.load %arg6[%c0_26, %c0_27] : memref<1x128xf32, #tpu.memory_space<vmem>>, vector<1x128xf32>
    %71 = vector.broadcast %70 : vector<1x128xf32> to vector<16x128xf32>
    %72 = arith.addf %69, %71 : vector<16x128xf32>
    %cst_28 = arith.constant 0.000000e+00 : f32
    %73 = vector.broadcast %cst_28 : f32 to vector<16x128xf32>
    %74 = arith.maximumf %72, %73 : vector<16x128xf32>
    %75 = arith.truncf %74 : vector<16x128xf32> to vector<16x128xbf16>
    %c0_29 = arith.constant 0 : index
    %c0_30 = arith.constant 0 : index
    %76 = vector.load %arg7[%c0_29, %c0_30] : memref<128x128xbf16, #tpu.memory_space<vmem>>, vector<128x128xbf16>
    %cst_31 = arith.constant dense<0.000000e+00> : vector<16x128xf32>
    %77 = tpu.matmul %75, %76, %cst_31 {dimension_numbers = #tpu.dot_dimension_numbers<[1], [0], [0], [1], [0, 0, 1, 1], [], []>} : vector<16x128xbf16>, vector<128x128xbf16>, vector<16x128xf32> -> vector<16x128xf32>
    %c0_32 = arith.constant 0 : index
    %c0_33 = arith.constant 0 : index
    %78 = vector.load %arg8[%c0_32, %c0_33] : memref<1x128xf32, #tpu.memory_space<vmem>>, vector<1x128xf32>
    %79 = vector.broadcast %78 : vector<1x128xf32> to vector<16x128xf32>
    %80 = arith.addf %77, %79 : vector<16x128xf32>
    %c0_34 = arith.constant 0 : index
    %81 = memref.load %arg2[%c0_34] : memref<1xf32, #tpu.memory_space<smem>>
    %82 = vector.broadcast %81 : f32 to vector<16x128xf32>
    %83 = arith.mulf %80, %82 : vector<16x128xf32>
    %c0_35 = arith.constant 0 : index
    %c0_36 = arith.constant 0 : index
    %84 = vector.load %arg9[%c0_35, %c0_36] : memref<16x128xf32, #tpu.memory_space<vmem>>, vector<16x128xf32>
    tpu.vector_store %arg9[%c0_35, %c0_36], %83 {strides = array<i32>} : memref<16x128xf32, #tpu.memory_space<vmem>>, vector<16x128xf32>,
    return
  }
  func.func @transform_0(%arg0: i32) -> (i32, i32) {
    %c0_i32 = arith.constant 0 : i32
    %c0_i32_0 = arith.constant 0 : i32
    return %arg0, %c0_i32 : i32, i32
  }
  func.func @transform_1(%arg0: i32) -> i32 {
    %c0_i32 = arith.constant 0 : i32
    %c0_i32_0 = arith.constant 0 : i32
    return %c0_i32 : i32
  }
  func.func @transform_2(%arg0: i32) -> (i32, i32) {
    %c0_i32 = arith.constant 0 : i32
    %c0_i32_0 = arith.constant 0 : i32
    %c0_i32_1 = arith.constant 0 : i32
    return %c0_i32, %c0_i32_0 : i32, i32
  }
  func.func @transform_3(%arg0: i32) -> (i32, i32) {
    %c0_i32 = arith.constant 0 : i32
    %c0_i32_0 = arith.constant 0 : i32
    %c0_i32_1 = arith.constant 0 : i32
    return %c0_i32, %c0_i32_0 : i32, i32
  }
  func.func @transform_4(%arg0: i32) -> (i32, i32) {
    %c0_i32 = arith.constant 0 : i32
    %c0_i32_0 = arith.constant 0 : i32
    %c0_i32_1 = arith.constant 0 : i32
    return %c0_i32, %c0_i32_0 : i32, i32
  }
  func.func @transform_5(%arg0: i32) -> (i32, i32) {
    %c0_i32 = arith.constant 0 : i32
    %c0_i32_0 = arith.constant 0 : i32
    %c0_i32_1 = arith.constant 0 : i32
    return %c0_i32, %c0_i32_0 : i32, i32
  }
  func.func @transform_6(%arg0: i32) -> (i32, i32) {
    %c0_i32 = arith.constant 0 : i32
    %c0_i32_0 = arith.constant 0 : i32
    %c0_i32_1 = arith.constant 0 : i32
    return %c0_i32, %c0_i32_0 : i32, i32
  }
  func.func @transform_7(%arg0: i32) -> (i32, i32) {
    %c0_i32 = arith.constant 0 : i32
    %c0_i32_0 = arith.constant 0 : i32
    %c0_i32_1 = arith.constant 0 : i32
    return %c0_i32, %c0_i32_0 : i32, i32
  }
  func.func @transform_8(%arg0: i32) -> (i32, i32) {
    %c0_i32 = arith.constant 0 : i32
    %c0_i32_0 = arith.constant 0 : i32
    return %arg0, %c0_i32 : i32, i32
  }
}

</mosaic_0001>

<llo_original>
// kernel: tpu_custom_call.1
$region0: #{tpu_custom_call.1}
  #allocation0 [shape = 'u32[]', space=smem, size = 0x4, offset = 0x4, fixed_abs, tag = 'smem constant byte address 0x4 - core index']
  #allocation1 [shape = 'u32[72,128]{1,0:T(1,128)}', space=vmem, size = 0x9000, scoped, tag = 'internal scratch']
  #allocation2 [shape = 'f32[1]{0:T(128)S(6)}', space=smem, size = 0x200, scoped, tag = 'scoped memory for tpu_custom_call.1']
  %s0 = inlined_call_operand.vmem [shape: s32[16,8], index: 0, kind: input, shape index: {}]
  %s1 = inlined_call_operand.<no memory space> [shape: f32[1], index: 1, kind: input, shape index: {}]
  %s2 = inlined_call_operand.hbm [shape: bf16[128,128], index: 2, kind: input, shape index: {}]
  %s3 = inlined_call_operand.vmem [shape: f32[1,128], index: 3, kind: input, shape index: {}]
  %s4 = inlined_call_operand.hbm [shape: bf16[128,128], index: 4, kind: input, shape index: {}]
  %s5 = inlined_call_operand.vmem [shape: f32[1,128], index: 5, kind: input, shape index: {}]
  %s6 = inlined_call_operand.hbm [shape: bf16[128,128], index: 6, kind: input, shape index: {}]
  %s7 = inlined_call_operand.vmem [shape: f32[1,128], index: 7, kind: input, shape index: {}]
  %s8 = inlined_call_operand.hbm [shape: f32[16,128], index: 8, kind: output, shape index: {}]
  %s9 = sld [smem:[#allocation0]]
  $region54: #{tpu_custom_call.1} parent=0
    _
  %s11 = ssub.s32 1, %s9
  %s12 = scalar_select 0, %s11, %s9
  %13 = sst [smem:[#allocation2]] %s1
  $region1: #{tpu_custom_call.1} parent=0
    #allocation3 [shape = 'u8[32768]{0}', space=vmem, size = 0x8000, scoped, tag = 'input window, operand 2, single buffered']
    #allocation4 [shape = 's32[1]{0}', space=sflag, size = 0x4, scoped, tag = 'scoped memory for tpu_custom_call.1']
    #allocation5 [shape = 's32[1]{0}', space=sflag, size = 0x4, scoped, tag = 'scoped memory for tpu_custom_call.1']
    #allocation6 [shape = 'u8[32768]{0}', space=vmem, size = 0x8000, scoped, tag = 'input window, operand 4, single buffered']
    #allocation7 [shape = 's32[1]{0}', space=sflag, size = 0x4, scoped, tag = 'scoped memory for tpu_custom_call.1']
    #allocation8 [shape = 'u8[32768]{0}', space=vmem, size = 0x8000, scoped, tag = 'input window, operand 6, single buffered']
    #allocation9 [shape = 'u8[8192]{0}', space=vmem, size = 0x2000, scoped, tag = 'output window, operand 0, single buffered']
    %14 = vsyncpa [#allocation4], 0
    %15 = vsyncpa [#allocation7], 0
    %16 = vsyncpa [#allocation5], 0
    // Predicated region
    $region2: #{tpu_custom_call.1} parent=1 // pred_check
      _
    $region3: #{tpu_custom_call.1} parent=1 // pred_check_branch
      %18 = sbr.rel (0) target = $region5
    $region4: #{tpu_custom_call.1} parent=1 // pred_region
      _
    $region5: #{tpu_custom_call.1} parent=1 // pred_fallthru
      _
    // Predicated region
    $region6: #{tpu_custom_call.1} parent=1 // pred_check
      _
    $region7: #{tpu_custom_call.1} parent=1 // pred_check_branch
      %20 = sbr.rel (0) target = $region9
    $region8: #{tpu_custom_call.1} parent=1 // pred_region
      _
    $region9: #{tpu_custom_call.1} parent=1 // pred_fallthru
      _
    // Predicated region
    $region10: #{tpu_custom_call.1} parent=1 // pred_check
      _
    $region11: #{tpu_custom_call.1} parent=1 // pred_check_branch
      %22 = sbr.rel (0) target = $region13
    $region12: #{tpu_custom_call.1} parent=1 // pred_region
      %24 = vsyncadd [#allocation4], 0
      %s25 = sshll.u32 %s2, 4
      %s26 = int_to_ptr.hbm [resolvable:$true] %s25
      %s27 = sshll.u32 [#allocation3], 4
      %s28 = int_to_ptr.vmem [resolvable:$true] %s27
      %33 = dma.hbm_to_vmem [thread:$0]  %s26, 1024, %s28, [#allocation4], 64, 64, 4
    $region13: #{tpu_custom_call.1} parent=1 // pred_fallthru
      _
    // Predicated region
    $region14: #{tpu_custom_call.1} parent=1 // pred_check
      _
    $region15: #{tpu_custom_call.1} parent=1 // pred_check_branch
      %35 = sbr.rel (0) target = $region17
    $region16: #{tpu_custom_call.1} parent=1 // pred_region
      _
    $region17: #{tpu_custom_call.1} parent=1 // pred_fallthru
      _
    // Predicated region
    $region18: #{tpu_custom_call.1} parent=1 // pred_check
      _
    $region19: #{tpu_custom_call.1} parent=1 // pred_check_branch
      %37 = sbr.rel (0) target = $region21
    $region20: #{tpu_custom_call.1} parent=1 // pred_region
      %39 = vsyncadd [#allocation7], 0
      %s40 = sshll.u32 %s4, 4
      %s41 = int_to_ptr.hbm [resolvable:$true] %s40
      %s42 = sshll.u32 [#allocation6], 4
      %s43 = int_to_ptr.vmem [resolvable:$true] %s42
      %48 = dma.hbm_to_vmem [thread:$0]  %s41, 1024, %s43, [#allocation7], 64, 64, 4
    $region21: #{tpu_custom_call.1} parent=1 // pred_fallthru
      _
    // Predicated region
    $region22: #{tpu_custom_call.1} parent=1 // pred_check
      _
    $region23: #{tpu_custom_call.1} parent=1 // pred_check_branch
      %50 = sbr.rel (0) target = $region25
    $region24: #{tpu_custom_call.1} parent=1 // pred_region
      _
    $region25: #{tpu_custom_call.1} parent=1 // pred_fallthru
      _
    // Predicated region
    $region26: #{tpu_custom_call.1} parent=1 // pred_check
      _
    $region27: #{tpu_custom_call.1} parent=1 // pred_check_branch
      %52 = sbr.rel (0) target = $region29
    $region28: #{tpu_custom_call.1} parent=1 // pred_region
      %54 = vsyncadd [#allocation7], 0
      %s55 = sshll.u32 %s6, 4
      %s56 = int_to_ptr.hbm [resolvable:$true] %s55
      %s57 = sshll.u32 [#allocation8], 4
      %s58 = int_to_ptr.vmem [resolvable:$true] %s57
      %63 = dma.hbm_to_vmem [thread:$0]  %s56, 1024, %s58, [#allocation7], 64, 64, 4
    $region29: #{tpu_custom_call.1} parent=1 // pred_fallthru
      _
    // Predicated region
    $region30: #{tpu_custom_call.1} parent=1 // pred_check
      _
    $region31: #{tpu_custom_call.1} parent=1 // pred_check_branch
      %65 = sbr.rel (0) target = $region33
    $region32: #{tpu_custom_call.1} parent=1 // pred_region
      _
    $region33: #{tpu_custom_call.1} parent=1 // pred_fallthru
      _
    // Predicated region
    $region34: #{tpu_custom_call.1} parent=1 // pred_check
      _
    $region35: #{tpu_custom_call.1} parent=1 // pred_check_branch
      %67 = sbr.rel (0) target = $region37
    $region36: #{tpu_custom_call.1} parent=1 // pred_region
      %69 = dma.done [#allocation4], 1024
    $region37: #{tpu_custom_call.1} parent=1 // pred_fallthru
      _
    // Predicated region
    $region38: #{tpu_custom_call.1} parent=1 // pred_check
      _
    $region39: #{tpu_custom_call.1} parent=1 // pred_check_branch
      %71 = sbr.rel (0) target = $region41
    $region40: #{tpu_custom_call.1} parent=1 // pred_region
      %73 = dma.done [#allocation7], 1024
    $region41: #{tpu_custom_call.1} parent=1 // pred_fallthru
      _
    // Predicated region
    $region42: #{tpu_custom_call.1} parent=1 // pred_check
      _
    $region43: #{tpu_custom_call.1} parent=1 // pred_check_branch
      %75 = sbr.rel (0) target = $region45
    $region44: #{tpu_custom_call.1} parent=1 // pred_region
      %77 = dma.done [#allocation7], 1024
    $region45: #{tpu_custom_call.1} parent=1 // pred_fallthru
      _
    %v78 = vld [vmem:[%s0] sm:$0xff]
    %v79 = vld [vmem:[%s0 + $0x8] sm:$0xff]
    %v80 = vlaneseq
    %v81 = vand.u32 %v80, 127
    %82 = vset.pattern.permute.xlu0 0
    %83 = vperm.xlu0 %82, %v78
    %v84 = vpop.permute.xlu0 %83
    %85 = vset.pattern.permute.xlu0 0
    %86 = vperm.xlu0 %85, %v79
    %v87 = vpop.permute.xlu0 %86
    %vm88 = vcmp.eq.s32.totalorder %v81, %v84
    %vm89 = vcmp.eq.s32.totalorder %v81, %v87
    %v90 = vsel %vm88, 1.0, 0.0
    %v91 = vsel %vm89, 1.0, 0.0
    %v92 = vadd.f32 %v90, 0.0
    %v93 = vadd.f32 %v91, 0.0
    %94 = vset.pattern.permute.xlu0 1
    %95 = vperm.xlu0 %94, %v78
    %v96 = vpop.permute.xlu0 %95
    %97 = vset.pattern.permute.xlu0 1
    %98 = vperm.xlu0 %97, %v79
    %v99 = vpop.permute.xlu0 %98
    %vm100 = vcmp.eq.s32.totalorder %v81, %v96
    %vm101 = vcmp.eq.s32.totalorder %v81, %v99
    %v102 = vsel %vm100, 1.0, 0.0
    %v103 = vsel %vm101, 1.0, 0.0
    %v104 = vadd.f32 %v92, %v102
    %v105 = vadd.f32 %v93, %v103
    %106 = vset.pattern.permute.xlu0 2
    %107 = vperm.xlu0 %106, %v78
    %v108 = vpop.permute.xlu0 %107
    %109 = vset.pattern.permute.xlu0 2
    %110 = vperm.xlu0 %109, %v79
    %v111 = vpop.permute.xlu0 %110
    %vm112 = vcmp.eq.s32.totalorder %v81, %v108
    %vm113 = vcmp.eq.s32.totalorder %v81, %v111
    %v114 = vsel %vm112, 1.0, 0.0
    %v115 = vsel %vm113, 1.0, 0.0
    %v116 = vadd.f32 %v104, %v114
    %v117 = vadd.f32 %v105, %v115
    %118 = vset.pattern.permute.xlu0 3
    %119 = vperm.xlu0 %118, %v78
    %v120 = vpop.permute.xlu0 %119
    %121 = vset.pattern.permute.xlu0 3
    %122 = vperm.xlu0 %121, %v79
    %v123 = vpop.permute.xlu0 %122
    %vm124 = vcmp.eq.s32.totalorder %v81, %v120
    %vm125 = vcmp.eq.s32.totalorder %v81, %v123
    %v126 = vsel %vm124, 1.0, 0.0
    %v127 = vsel %vm125, 1.0, 0.0
    %v128 = vadd.f32 %v116, %v126
    %v129 = vadd.f32 %v117, %v127
    %130 = vset.pattern.permute.xlu0 4
    %131 = vperm.xlu0 %130, %v78
    %v132 = vpop.permute.xlu0 %131
    %133 = vset.pattern.permute.xlu0 4
    %134 = vperm.xlu0 %133, %v79
    %v135 = vpop.permute.xlu0 %134
    %vm136 = vcmp.eq.s32.totalorder %v81, %v132
    %vm137 = vcmp.eq.s32.totalorder %v81, %v135
    %v138 = vsel %vm136, 1.0, 0.0
    %v139 = vsel %vm137, 1.0, 0.0
    %v140 = vadd.f32 %v128, %v138
    %v141 = vadd.f32 %v129, %v139
    %142 = vset.pattern.permute.xlu0 5
    %143 = vperm.xlu0 %142, %v78
    %v144 = vpop.permute.xlu0 %143
    %145 = vset.pattern.permute.xlu0 5
    %146 = vperm.xlu0 %145, %v79
    %v147 = vpop.permute.xlu0 %146
    %vm148 = vcmp.eq.s32.totalorder %v81, %v144
    %vm149 = vcmp.eq.s32.totalorder %v81, %v147
    %v150 = vsel %vm148, 1.0, 0.0
    %v151 = vsel %vm149, 1.0, 0.0
    %v152 = vadd.f32 %v140, %v150
    %v153 = vadd.f32 %v141, %v151
    %154 = vset.pattern.permute.xlu0 6
    %155 = vperm.xlu0 %154, %v78
    %v156 = vpop.permute.xlu0 %155
    %157 = vset.pattern.permute.xlu0 6
    %158 = vperm.xlu0 %157, %v79
    %v159 = vpop.permute.xlu0 %158
    %vm160 = vcmp.eq.s32.totalorder %v81, %v156
    %vm161 = vcmp.eq.s32.totalorder %v81, %v159
    %v162 = vsel %vm160, 1.0, 0.0
    %v163 = vsel %vm161, 1.0, 0.0
    %v164 = vadd.f32 %v152, %v162
    %v165 = vadd.f32 %v153, %v163
    %166 = vset.pattern.permute.xlu0 7
    %167 = vperm.xlu0 %166, %v78
    %v168 = vpop.permute.xlu0 %167
    %169 = vset.pattern.permute.xlu0 7
    %170 = vperm.xlu0 %169, %v79
    %v171 = vpop.permute.xlu0 %170
    %vm172 = vcmp.eq.s32.totalorder %v81, %v168
    %vm173 = vcmp.eq.s32.totalorder %v81, %v171
    %v174 = vsel %vm172, 1.0, 0.0
    %v175 = vsel %vm173, 1.0, 0.0
    %v176 = vadd.f32 %v164, %v174
    %v177 = vadd.f32 %v165, %v175
    %v178 = vpack.c.bf16 %v177, %v176
    %v179 = vld [vmem:[#allocation3] sm:$0xf]
    %v180 = vld [vmem:[#allocation3 + $0x4] sm:$0xf]
    %v181 = vld [vmem:[#allocation3 + $0x8] sm:$0xf]
    %v182 = vld [vmem:[#allocation3 + $0xc] sm:$0xf]
    %v183 = vld [vmem:[#allocation3 + $0x10] sm:$0xf]
    %v184 = vld [vmem:[#allocation3 + $0x14] sm:$0xf]
    %v185 = vld [vmem:[#allocation3 + $0x18] sm:$0xf]
    %v186 = vld [vmem:[#allocation3 + $0x1c] sm:$0xf]
    %v187 = vld [vmem:[#allocation3 + $0x20] sm:$0xf]
    %v188 = vld [vmem:[#allocation3 + $0x24] sm:$0xf]
    %v189 = vld [vmem:[#allocation3 + $0x28] sm:$0xf]
    %v190 = vld [vmem:[#allocation3 + $0x2c] sm:$0xf]
    %v191 = vld [vmem:[#allocation3 + $0x30] sm:$0xf]
    %v192 = vld [vmem:[#allocation3 + $0x34] sm:$0xf]
    %v193 = vld [vmem:[#allocation3 + $0x38] sm:$0xf]
    %v194 = vld [vmem:[#allocation3 + $0x3c] sm:$0xf]
    %v195 = vld [vmem:[%s3] sm:$0x1]
    %v197 = vperm.slane %v195, 0
    %v215 = vunpack.c.l.b16 %v179
    %v216 = vunpack.c.l.b16 %v180
    %v217 = vunpack.c.l.b16 %v181
    %v218 = vunpack.c.l.b16 %v182
    %v219 = vunpack.c.l.b16 %v183
    %v220 = vunpack.c.l.b16 %v184
    %v221 = vunpack.c.l.b16 %v185
    %v222 = vunpack.c.l.b16 %v186
    %v223 = vunpack.c.l.b16 %v187
    %v224 = vunpack.c.l.b16 %v188
    %v225 = vunpack.c.l.b16 %v189
    %v226 = vunpack.c.l.b16 %v190
    %v227 = vunpack.c.l.b16 %v191
    %v228 = vunpack.c.l.b16 %v192
    %v229 = vunpack.c.l.b16 %v193
    %v230 = vunpack.c.l.b16 %v194
    %v231 = vpack.c.b16 %v216, %v215
    %v232 = vpack.c.b16 %v218, %v217
    %v233 = vpack.c.b16 %v220, %v219
    %v234 = vpack.c.b16 %v222, %v221
    %v235 = vpack.c.b16 %v224, %v223
    %v236 = vpack.c.b16 %v226, %v225
    %v237 = vpack.c.b16 %v228, %v227
    %v238 = vpack.c.b16 %v230, %v229
    %247 = vmatpush.bf16.msra.mxu0 %v238
    %248 = vmatpush.bf16.msra.mxu0 %v237
    %249 = vmatpush.bf16.msra.mxu0 %v236
    %250 = vmatpush.bf16.msra.mxu0 %v235
    %251 = vmatpush.bf16.msra.mxu0 %v234
    %252 = vmatpush.bf16.msra.mxu0 %v233
    %253 = vmatpush.bf16.msra.mxu0 %v232
    %254 = vmatpush.bf16.msra.mxu0 %v231
    %255 = vmatmul.bf16.gmra.mxu0 %v178
    %v256 = vpop.f32.mrf.mxu0
    %v257 = vadd.f32 %v197, %v256
    %v258 = vpop.f32.mrf.mxu0
    %v259 = vadd.f32 %v197, %v258
    %260 = vdwg.mxu0
    %v261 = vmax.f32 %v257, 0.0
    %v262 = vmax.f32 %v259, 0.0
    %v263 = vpack.c.bf16 %v262, %v261
    %v264 = vld [vmem:[#allocation6] sm:$0xf]
    %v265 = vld [vmem:[#allocation6 + $0x4] sm:$0xf]
    %v266 = vld [vmem:[#allocation6 + $0x8] sm:$0xf]
    %v267 = vld [vmem:[#allocation6 + $0xc] sm:$0xf]
    %v268 = vld [vmem:[#allocation6 + $0x10] sm:$0xf]
    %v269 = vld [vmem:[#allocation6 + $0x14] sm:$0xf]
    %v270 = vld [vmem:[#allocation6 + $0x18] sm:$0xf]
    %v271 = vld [vmem:[#allocation6 + $0x1c] sm:$0xf]
    %v272 = vld [vmem:[#allocation6 + $0x20] sm:$0xf]
    %v273 = vld [vmem:[#allocation6 + $0x24] sm:$0xf]
    %v274 = vld [vmem:[#allocation6 + $0x28] sm:$0xf]
    %v275 = vld [vmem:[#allocation6 + $0x2c] sm:$0xf]
    %v276 = vld [vmem:[#allocation6 + $0x30] sm:$0xf]
    %v277 = vld [vmem:[#allocation6 + $0x34] sm:$0xf]
    %v278 = vld [vmem:[#allocation6 + $0x38] sm:$0xf]
    %v279 = vld [vmem:[#allocation6 + $0x3c] sm:$0xf]
    %v280 = vld [vmem:[%s5] sm:$0x1]
    %v282 = vperm.slane %v280, 0
    %v300 = vunpack.c.l.b16 %v264
    %v301 = vunpack.c.l.b16 %v265
    %v302 = vunpack.c.l.b16 %v266
    %v303 = vunpack.c.l.b16 %v267
    %v304 = vunpack.c.l.b16 %v268
    %v305 = vunpack.c.l.b16 %v269
    %v306 = vunpack.c.l.b16 %v270
    %v307 = vunpack.c.l.b16 %v271
    %v308 = vunpack.c.l.b16 %v272
    %v309 = vunpack.c.l.b16 %v273
    %v310 = vunpack.c.l.b16 %v274
    %v311 = vunpack.c.l.b16 %v275
    %v312 = vunpack.c.l.b16 %v276
    %v313 = vunpack.c.l.b16 %v277
    %v314 = vunpack.c.l.b16 %v278
    %v315 = vunpack.c.l.b16 %v279
    %v316 = vpack.c.b16 %v301, %v300
    %v317 = vpack.c.b16 %v303, %v302
    %v318 = vpack.c.b16 %v305, %v304
    %v319 = vpack.c.b16 %v307, %v306
    %v320 = vpack.c.b16 %v309, %v308
    %v321 = vpack.c.b16 %v311, %v310
    %v322 = vpack.c.b16 %v313, %v312
    %v323 = vpack.c.b16 %v315, %v314
    %332 = vmatpush.bf16.msra.mxu0 %v323
    %333 = vmatpush.bf16.msra.mxu0 %v322
    %334 = vmatpush.bf16.msra.mxu0 %v321
    %335 = vmatpush.bf16.msra.mxu0 %v320
    %336 = vmatpush.bf16.msra.mxu0 %v319
    %337 = vmatpush.bf16.msra.mxu0 %v318
    %338 = vmatpush.bf16.msra.mxu0 %v317
    %339 = vmatpush.bf16.msra.mxu0 %v316
    %340 = vmatmul.bf16.gmra.mxu0 %v263
    %v341 = vpop.f32.mrf.mxu0
    %v342 = vadd.f32 %v282, %v341
    %v343 = vpop.f32.mrf.mxu0
    %v344 = vadd.f32 %v282, %v343
    %345 = vdwg.mxu0
    %v346 = vmax.f32 %v342, 0.0
    %v347 = vmax.f32 %v344, 0.0
    %v348 = vpack.c.bf16 %v347, %v346
    %v349 = vld [vmem:[#allocation8] sm:$0xf]
    %v350 = vld [vmem:[#allocation8 + $0x4] sm:$0xf]
    %v351 = vld [vmem:[#allocation8 + $0x8] sm:$0xf]
    %v352 = vld [vmem:[#allocation8 + $0xc] sm:$0xf]
    %v353 = vld [vmem:[#allocation8 + $0x10] sm:$0xf]
    %v354 = vld [vmem:[#allocation8 + $0x14] sm:$0xf]
    %v355 = vld [vmem:[#allocation8 + $0x18] sm:$0xf]
    %v356 = vld [vmem:[#allocation8 + $0x1c] sm:$0xf]
    %v357 = vld [vmem:[#allocation8 + $0x20] sm:$0xf]
    %v358 = vld [vmem:[#allocation8 + $0x24] sm:$0xf]
    %v359 = vld [vmem:[#allocation8 + $0x28] sm:$0xf]
    %v360 = vld [vmem:[#allocation8 + $0x2c] sm:$0xf]
    %v361 = vld [vmem:[#allocation8 + $0x30] sm:$0xf]
    %v362 = vld [vmem:[#allocation8 + $0x34] sm:$0xf]
    %v363 = vld [vmem:[#allocation8 + $0x38] sm:$0xf]
    %v364 = vld [vmem:[#allocation8 + $0x3c] sm:$0xf]
    %v365 = vld [vmem:[%s7] sm:$0x1]
    %v367 = vperm.slane %v365, 0
    %v385 = vunpack.c.l.b16 %v349
    %v386 = vunpack.c.l.b16 %v350
    %v387 = vunpack.c.l.b16 %v351
    %v388 = vunpack.c.l.b16 %v352
    %v389 = vunpack.c.l.b16 %v353
    %v390 = vunpack.c.l.b16 %v354
    %v391 = vunpack.c.l.b16 %v355
    %v392 = vunpack.c.l.b16 %v356
    %v393 = vunpack.c.l.b16 %v357
    %v394 = vunpack.c.l.b16 %v358
    %v395 = vunpack.c.l.b16 %v359
    %v396 = vunpack.c.l.b16 %v360
    %v397 = vunpack.c.l.b16 %v361
    %v398 = vunpack.c.l.b16 %v362
    %v399 = vunpack.c.l.b16 %v363
    %v400 = vunpack.c.l.b16 %v364
    %v401 = vpack.c.b16 %v386, %v385
    %v402 = vpack.c.b16 %v388, %v387
    %v403 = vpack.c.b16 %v390, %v389
    %v404 = vpack.c.b16 %v392, %v391
    %v405 = vpack.c.b16 %v394, %v393
    %v406 = vpack.c.b16 %v396, %v395
    %v407 = vpack.c.b16 %v398, %v397
    %v408 = vpack.c.b16 %v400, %v399
    %417 = vmatpush.bf16.msra.mxu0 %v408
    %418 = vmatpush.bf16.msra.mxu0 %v407
    %419 = vmatpush.bf16.msra.mxu0 %v406
    %420 = vmatpush.bf16.msra.mxu0 %v405
    %421 = vmatpush.bf16.msra.mxu0 %v404
    %422 = vmatpush.bf16.msra.mxu0 %v403
    %423 = vmatpush.bf16.msra.mxu0 %v402
    %424 = vmatpush.bf16.msra.mxu0 %v401
    %425 = vmatmul.bf16.gmra.mxu0 %v348
    %v426 = vpop.f32.mrf.mxu0
    %v427 = vadd.f32 %v367, %v426
    %v428 = vpop.f32.mrf.mxu0
    %v429 = vadd.f32 %v367, %v428
    %430 = vdwg.mxu0
    %s431 = sld [smem:[#allocation2]]
    %v432 = vstv %s431
    %v433 = vmul.f32 %v427, %v432
    %v434 = vmul.f32 %v429, %v432
    %435 = vst [vmem:[#allocation9] sm:$0xff] %v433
    %436 = vst [vmem:[#allocation9 + $0x8] sm:$0xff] %v434
    // Predicated region
    $region46: #{tpu_custom_call.1} parent=1 // pred_check
      _
    $region47: #{tpu_custom_call.1} parent=1 // pred_check_branch
      %438 = sbr.rel (0) target = $region49
    $region48: #{tpu_custom_call.1} parent=1 // pred_region
      %440 = vsyncadd [#allocation5], 0
      %s441 = sshll.u32 [#allocation9], 4
      %s442 = int_to_ptr.vmem [resolvable:$true] %s441
      %s443 = sshll.u32 %s8, 4
      %s444 = int_to_ptr.hbm [resolvable:$true] %s443
      %449 = dma.vmem_to_hbm [thread:$0]  %s442, 256, %s444, [#allocation5], 128, 128, 8
    $region49: #{tpu_custom_call.1} parent=1 // pred_fallthru
      _
    // Predicated region
    $region50: #{tpu_custom_call.1} parent=1 // pred_check
      _
    $region51: #{tpu_custom_call.1} parent=1 // pred_check_branch
      %451 = sbr.rel (0) target = $region53
    $region52: #{tpu_custom_call.1} parent=1 // pred_region
      %453 = dma.done [#allocation5], 256
    $region53: #{tpu_custom_call.1} parent=1 // pred_fallthru
      _
    %454 = vsyncpa [#allocation4], 1
    %455 = vsyncpa [#allocation7], 1
    %456 = vsyncpa [#allocation5], 1

</llo_original>
